<compile_context>
chip_gen: v7x
topology: tpu7x:2x2x1
jax: 0.10.0
libtpu: 0.0.40
codegen_flags: <defaults>
</compile_context>

<pallas_src>
import functools
import numpy as np
import jax
import jax.numpy as jnp
from jax import lax
from jax.experimental import pallas as pl
from jax.experimental.pallas import tpu as pltpu

NEG_INF = -1e18  # matches `neg_inf` in the reference code


def _pick_tile(dim, candidates):
    """Largest candidate that evenly divides dim, else the full dim."""
    for c in candidates:
        if c <= dim and dim % c == 0:
            return c
    return dim


@functools.lru_cache(maxsize=None)
def _vmem_limit_bytes():
    """~96 MiB on 128-MiB VMEM parts (v5e/v6e), well under 64 MiB on v7x."""
    try:
        cap = int(getattr(pltpu.get_tpu_info(), "vmem_capacity_bytes",
                          128 * 1024 * 1024))
    except Exception:
        cap = 128 * 1024 * 1024
    return int(max(32 * 1024 * 1024, min(96 * 1024 * 1024, cap - 16 * 1024 * 1024)))


# ------------------------ tiled linear: y = x @ W + b ------------------------ #

def _linear_kernel(x_ref, w_ref, b_ref, o_ref, acc_ref):
    k = pl.program_id(2)

    @pl.when(k == 0)
    def _():
        acc_ref[...] = jnp.zeros_like(acc_ref)

    # bf16 inputs (already cast once in the wrapper), f32 accumulation.
    acc_ref[...] += jnp.dot(x_ref[...], w_ref[...],
                            preferred_element_type=jnp.float32)

    @pl.when(k == pl.num_programs(2) - 1)
    def _():
        o_ref[...] = (acc_ref[...] + b_ref[...]).astype(o_ref.dtype)


def pallas_linear(x2d_bf16, w_bf16, b_f32, out_dtype=jnp.bfloat16):
    """x2d_bf16: (M, K) bf16, w_bf16: (K, N) bf16, b_f32: (N,) f32 -> (M, N)."""
    M, K = x2d_bf16.shape
    K2, N = w_bf16.shape
    assert K == K2
    # tiles are multiples of 16 (bf16 sublane packing) or the full dimension.
    tm = _pick_tile(M, (512, 256, 128, 64, 32, 16))
    tn = _pick_tile(N, (256, 128))
    tk = _pick_tile(K, (512, 256, 128))
    grid = (M // tm, N // tn, K // tk)
    return pl.pallas_call(
        _linear_kernel,
        out_shape=jax.ShapeDtypeStruct((M, N), out_dtype),
        grid=grid,
        in_specs=[
            pl.BlockSpec((tm, tk), lambda i, j, k: (i, k)),
            pl.BlockSpec((tk, tn), lambda i, j, k: (k, j)),
            pl.BlockSpec((1, tn), lambda i, j, k: (0, j)),
        ],
        out_specs=pl.BlockSpec((tm, tn), lambda i, j, k: (i, j)),
        scratch_shapes=[pltpu.VMEM((tm, tn), jnp.float32)],
        compiler_params=pltpu.CompilerParams(
            dimension_semantics=("parallel", "parallel", "arbitrary"),
            vmem_limit_bytes=_vmem_limit_bytes(),
        ),
    )(x2d_bf16, w_bf16, b_f32.reshape(1, N))


# ----------- multi-head SDPA with fused output projection (per batch) --------- #

def _mha_kernel(*refs, n_src, H, d_k, d_v, with_attn):
    """One grid step = one batch element, all heads, W_0 projection fused.

    refs layout: mask, src_0..src_{n_src-1}, W0, b0, out, [attn]
      n_src == 1: src_0 = fused [Q|K|V] slab   (L,  H*(2*d_k+d_v)) bf16
      n_src == 2: src_0 = Q slab (Lq, H*d_k),  src_1 = fused [K|V] slab
      n_src == 3: src_0 = Q, src_1 = K, src_2 = V
    mask: (1, Lq, Lk) int8 (non-zero == masked), shared by all heads.
    out : (Lq, d_model) f32.  attn (optional): (H, 1, Lq, Lk) f32.
    """
    mask_ref = refs[0]
    srcs = refs[1:1 + n_src]
    w0_ref = refs[1 + n_src]
    b0_ref = refs[2 + n_src]
    out_ref = refs[3 + n_src]
    attn_ref = refs[4 + n_src] if with_attn else None

    # Slice Q/K/V columns out of the fused projection slab(s) in VMEM
    # (no HBM column-slice copies between kernels).
    if n_src == 1:
        slab = srcs[0][...]
        q2 = slab[:, :H * d_k]
        k2 = slab[:, H * d_k:2 * H * d_k]
        v2 = slab[:, 2 * H * d_k:]
    elif n_src == 2:
        q2 = srcs[0][...]
        kv = srcs[1][...]
        k2 = kv[:, :H * d_k]
        v2 = kv[:, H * d_k:]
    else:
        q2, k2, v2 = srcs[0][...], srcs[1][...], srcs[2][...]

    masked = mask_ref[0] != 0                    # (Lq, Lk) bool, shared by heads
    w0 = w0_ref[...]                             # (H*d_v, d_model) bf16, resident
    Lq = q2.shape[0]
    d_model = w0.shape[1]
    acc = jnp.zeros((Lq, d_model), jnp.float32)  # fused W_0 accumulator

    # TODO(synk): for large H / long Lq use a fori_loop (or head grid axis) and an
    #             Lk-tiled online softmax; static unroll is fine at these sizes.
    for h in range(H):
        qh = q2[:, h * d_k:(h + 1) * d_k]        # 1/temperature pre-folded into W_Q
        kh = k2[:, h * d_k:(h + 1) * d_k]
        vh = v2[:, h * d_v:(h + 1) * d_v]

        # QK^T as a contraction on the last axes (no explicit transpose), bf16 in,
        # f32 accumulate on the MXU.
        s = lax.dot_general(qh, kh, (((1,), (1,)), ((), ())),
                            preferred_element_type=jnp.float32)   # (Lq, Lk)
        s = jnp.where(masked, NEG_INF, s)        # masked_fill semantics

        # numerically-stable softmax, stats and probs in f32, exact division
        m = jnp.max(s, axis=-1, keepdims=True)
        e = jnp.exp(s - m)
        p = e / jnp.sum(e, axis=-1, keepdims=True)

        if with_attn:
            attn_ref[h, 0] = p                   # f32 writeback (reference dtype)

        ctx = jnp.dot(p.astype(jnp.bfloat16), vh,
                      preferred_element_type=jnp.float32)          # (Lq, d_v)
        acc = acc + jnp.dot(ctx.astype(jnp.bfloat16),
                            w0[h * d_v:(h + 1) * d_v, :],
                            preferred_element_type=jnp.float32)

    out_ref[...] = (acc + b0_ref[...]).astype(out_ref.dtype)


def pallas_mha_attention(srcs, mask_i8, w0_bf16, b0_f32, *, B, H, Lq, Lk,
                         d_k, d_v, return_attn=True):
    """srcs: 1-3 bf16 projection slabs (see _mha_kernel docstring).
    Returns (B*Lq, d_model) f32 output and optionally head-major (H, B, Lq, Lk)
    f32 attention probabilities (return_attn=False is the performance path)."""
    n_src = len(srcs)
    d_model = w0_bf16.shape[1]
    kernel = functools.partial(_mha_kernel, n_src=n_src, H=H, d_k=d_k, d_v=d_v,
                               with_attn=return_attn)

    in_specs = [pl.BlockSpec((1, Lq, Lk), lambda b: (b, 0, 0))]     # mask (reused by heads)
    row_blocks = [Lq] + [Lk] * (n_src - 1)
    for arr, rows in zip(srcs, row_blocks):
        width = arr.shape[1]
        in_specs.append(pl.BlockSpec((rows, width), lambda b: (b, 0)))
    in_specs.append(pl.BlockSpec((H * d_v, d_model), lambda b: (0, 0)))  # W0 resident
    in_specs.append(pl.BlockSpec((1, d_model), lambda b: (0, 0)))        # b0 resident

    if return_attn:
        out_shape = (jax.ShapeDtypeStruct((B * Lq, d_model), jnp.float32),
                     jax.ShapeDtypeStruct((H, B, Lq, Lk), jnp.float32))
        out_specs = (pl.BlockSpec((Lq, d_model), lambda b: (b, 0)),
                     pl.BlockSpec((H, 1, Lq, Lk), lambda b: (0, b, 0, 0)))
    else:
        out_shape = jax.ShapeDtypeStruct((B * Lq, d_model), jnp.float32)
        out_specs = pl.BlockSpec((Lq, d_model), lambda b: (b, 0))

    res = pl.pallas_call(
        kernel,
        out_shape=out_shape,
        grid=(B,),
        in_specs=in_specs,
        out_specs=out_specs,
        compiler_params=pltpu.CompilerParams(
            dimension_semantics=("parallel",),
            vmem_limit_bytes=_vmem_limit_bytes(),
        ),
    )(mask_i8, *srcs, w0_bf16, b0_f32.reshape(1, d_model))

    if return_attn:
        return res[0], res[1]
    return res, None


# ------------------------------- mask building ------------------------------- #

def build_mask(B, Lq, Lk, key_padding_mask=None, attn_mask=None):
    """Combined boolean mask (True == masked). Mirrors the reference quirks:
    key_padding_mask (B, Lq) is applied along the QUERY axis."""
    # TODO(synk): only bool/uint8-style masks supported (not additive float masks).
    mask = jnp.zeros((B, Lq, Lk), dtype=jnp.bool_)
    if attn_mask is not None:
        am = attn_mask
        if am.ndim == 2:
            am = am[None]
        mask = jnp.logical_or(mask, am.astype(bool))
    if key_padding_mask is not None:
        mask = jnp.logical_or(mask, key_padding_mask.astype(bool)[:, :, None])
    return mask


# --------------------------- Module re-implementation ------------------------ #

class MultiHeadAttentionPallas:
    """MultiHeadAttention(debug_num=0) forward pass (eval-mode: dropout omitted)."""

    def __init__(self, d_model, num_heads, d_k, d_v, key):
        self.num_heads = num_heads
        self.d_k = d_k
        self.d_v = d_v
        self.d_model = d_model
        self.temperature = float(np.power(d_k, 0.5))

        ks = jax.random.split(key, 8)

        def init_linear(kw, kb, fan_in, fan_out):
            # torch nn.Linear default: U(-1/sqrt(fan_in), 1/sqrt(fan_in))
            bound = 1.0 / np.sqrt(fan_in)
            w = jax.random.uniform(kw, (fan_in, fan_out), jnp.float32, -bound, bound)
            b = jax.random.uniform(kb, (fan_out,), jnp.float32, -bound, bound)
            return w, b

        # f32 master parameters (used by the pure-JAX reference check).
        self.Wq_f32, self.bq_f32 = init_linear(ks[0], ks[1], d_model, num_heads * d_k)
        self.Wk_f32, self.bk_f32 = init_linear(ks[2], ks[3], d_model, num_heads * d_k)
        self.Wv_f32, self.bv_f32 = init_linear(ks[4], ks[5], d_model, num_heads * d_v)
        self.W0_f32, self.b0_f32 = init_linear(ks[6], ks[7], num_heads * d_v, d_model)

        # Kernel parameters: 1/temperature folded into the Q projection, bf16 weights.
        inv_t = 1.0 / self.temperature
        self.Wq = (self.Wq_f32 * inv_t).astype(jnp.bfloat16)
        self.bq = self.bq_f32 * inv_t
        self.Wk = self.Wk_f32.astype(jnp.bfloat16)
        self.bk = self.bk_f32
        self.Wv = self.Wv_f32.astype(jnp.bfloat16)
        self.bv = self.bv_f32
        self.W0 = self.W0_f32.astype(jnp.bfloat16)
        self.b0 = self.b0_f32

        # Pre-fused projection weights (single matmul for self-attn / shared KV).
        self.Wqkv = jnp.concatenate([self.Wq, self.Wk, self.Wv], axis=1)
        self.bqkv = jnp.concatenate([self.bq, self.bk, self.bv], axis=0)
        self.Wkv = jnp.concatenate([self.Wk, self.Wv], axis=1)
        self.bkv = jnp.concatenate([self.bk, self.bv], axis=0)

    def __call__(self, q, k, v, key_padding_mask=None, attn_mask=None,
                 return_attn=True):
        B, Lq, dm = q.shape
        _, Lk, _ = k.shape
        H, dk, dv = self.num_heads, self.d_k, self.d_v

        # -------- projections (fused when inputs are shared) --------
        # bf16 activations: cast once here; kernels carry bf16 end-to-end.
        # Note: `is` checks are object identity -> fast path only when literally
        # the same array is passed (fine for eager use; under jit it degrades
        # gracefully to the un-fused path).
        q_bf16 = q.reshape(B * Lq, dm).astype(jnp.bfloat16)
        if q is k and k is v:
            srcs = [pallas_linear(q_bf16, self.Wqkv, self.bqkv)]       # (M, H*(2dk+dv))
        elif k is v:
            k_bf16 = k.reshape(B * Lk, dm).astype(jnp.bfloat16)
            srcs = [pallas_linear(q_bf16, self.Wq, self.bq),           # (M, H*dk)
                    pallas_linear(k_bf16, self.Wkv, self.bkv)]         # (M, H*(dk+dv))
        else:
            k_bf16 = k.reshape(B * Lk, dm).astype(jnp.bfloat16)
            v_bf16 = v.reshape(B * Lk, dm).astype(jnp.bfloat16)
            srcs = [pallas_linear(q_bf16, self.Wq, self.bq),
                    pallas_linear(k_bf16, self.Wk, self.bk),
                    pallas_linear(v_bf16, self.Wv, self.bv)]

        # -------- combined boolean mask (True == masked) --------
        mask_i8 = build_mask(B, Lq, Lk, key_padding_mask, attn_mask).astype(jnp.int8)

        # -------- attention + fused W_0 projection (one kernel) --------
        out2d, attn_hm = pallas_mha_attention(
            srcs, mask_i8, self.W0, self.b0, B=B, H=H, Lq=Lq, Lk=Lk,
            d_k=dk, d_v=dv, return_attn=return_attn)
        # TODO(synk): attention dropout (p=0.1) omitted -> eval-mode semantics.

        out = out2d.reshape(B, Lq, dm)
        if return_attn:
            # reference layout quirk: head-major (H*B, Lq, Lk).view(B, H, Lq, Lk)
            attn = attn_hm.reshape(B, H, Lq, Lk)
            return out, attn
        return out, None


# ------------------------ pure-JAX reference (torch math) -------------------- #

def reference_forward(mha, q, k, v, key_padding_mask=None, attn_mask=None):
    """f32 reference of the PyTorch module's forward (eval mode)."""
    B, Lq, dm = q.shape
    _, Lk, _ = k.shape
    H, dk, dv = mha.num_heads, mha.d_k, mha.d_v

    qp = q.reshape(B * Lq, dm) @ mha.Wq_f32 + mha.bq_f32
    kp = k.reshape(B * Lk, dm) @ mha.Wk_f32 + mha.bk_f32
    vp = v.reshape(B * Lk, dm) @ mha.Wv_f32 + mha.bv_f32

    qh = qp.reshape(B, Lq, H, dk).transpose(2, 0, 1, 3)   # (H, B, Lq, dk)
    kh = kp.reshape(B, Lk, H, dk).transpose(2, 0, 1, 3)
    vh = vp.reshape(B, Lk, H, dv).transpose(2, 0, 1, 3)

    s = jnp.einsum('hbqd,hbkd->hbqk', qh, kh) / mha.temperature
    mask = build_mask(B, Lq, Lk, key_padding_mask, attn_mask)
    s = jnp.where(mask[None], NEG_INF, s)
    p = jax.nn.softmax(s, axis=-1)                        # (H, B, Lq, Lk)

    ctx = jnp.einsum('hbqk,hbkd->hbqd', p, vh)
    ctx = ctx.transpose(1, 2, 0, 3).reshape(B, Lq, H * dv)
    out = ctx @ mha.W0_f32 + mha.b0_f32

    attn = p.reshape(B, H, Lq, Lk)                        # mirrors torch .view quirk
    return out.reshape(B, Lq, dm), attn


# --------------------------------- Driver ------------------------------------ #

if __name__ == "__main__":
    # L is a multiple of 16 so per-batch bf16 blocks align with (16, 128) packing.
    B, L, d_model, H, d_k, d_v = 2, 16, 32, 4, 8, 8

    root = jax.random.PRNGKey(0)
    k_param, k_x, k_q2, k_kv2 = jax.random.split(root, 4)

    mha = MultiHeadAttentionPallas(d_model, H, d_k, d_v, k_param)

    x = jax.random.normal(k_x, (B, L, d_model), dtype=jnp.float32)

    # causal attn_mask (True above the diagonal = masked), bool (Lq, Lk)
    attn_mask = jnp.triu(jnp.ones((L, L), dtype=bool), k=1)
    # key_padding_mask: last token of each sequence padded, bool (B, Lq)
    key_padding_mask = jnp.zeros((B, L), dtype=bool).at[:, -1].set(True)

    # 1) self-attention: q = k = v -> fused QKV projection path
    out, attn = mha(x, x, x, key_padding_mask=key_padding_mask, attn_mask=attn_mask)
    out = jax.block_until_ready(out)
    attn = jax.block_until_ready(attn)
    assert out.shape == (B, L, d_model)
    assert attn.shape == (B, H, L, L)
    assert bool(jnp.all(jnp.isfinite(out)))
    assert bool(jnp.all(jnp.isfinite(attn)))
    ref_out, ref_attn = reference_forward(mha, x, x, x, key_padding_mask, attn_mask)
    # bf16 weights/activations in the kernel vs f32 reference -> ~1e-2 tolerance.
    np.testing.assert_allclose(np.asarray(out), np.asarray(ref_out),
                               rtol=3e-2, atol=3e-2)
    np.testing.assert_allclose(np.asarray(attn), np.asarray(ref_attn),
                               rtol=3e-2, atol=3e-2)

    # 2) cross-attention: q != (k == v) -> fused KV projection path
    q2 = jax.random.normal(k_q2, (B, L, d_model), dtype=jnp.float32)
    kv = jax.random.normal(k_kv2, (B, L, d_model), dtype=jnp.float32)
    out2, attn2 = mha(q2, kv, kv, key_padding_mask=key_padding_mask,
                      attn_mask=attn_mask)
    out2 = jax.block_until_ready(out2)
    assert out2.shape == (B, L, d_model)
    assert bool(jnp.all(jnp.isfinite(out2)))
    ref_out2, ref_attn2 = reference_forward(mha, q2, kv, kv, key_padding_mask,
                                            attn_mask)
    np.testing.assert_allclose(np.asarray(out2), np.asarray(ref_out2),
                               rtol=3e-2, atol=3e-2)
    np.testing.assert_allclose(np.asarray(attn2), np.asarray(ref_attn2),
                               rtol=3e-2, atol=3e-2)

    print("KERNEL_OK")
</pallas_src>

<mosaic_0001>
module attributes {stable_mosaic.version = 11 : i64} {
  func.func @_linear_kernel(%arg0: i32, %arg1: i32, %arg2: i32, %arg3: memref<32x32xbf16, #tpu.memory_space<vmem>>, %arg4: memref<32x96xbf16, #tpu.memory_space<vmem>>, %arg5: memref<1x96xf32, #tpu.memory_space<vmem>>, %arg6: memref<32x96xbf16, #tpu.memory_space<vmem>>, %arg7: memref<32x96xf32, #tpu.memory_space<vmem>>) attributes {dimension_semantics = [#tpu.dimension_semantics<parallel>, #tpu.dimension_semantics<parallel>, #tpu.dimension_semantics<arbitrary>], iteration_bounds = array<i64: 1, 1, 1>, scalar_prefetch = 0 : i64, scratch_operands = 1 : i64, tpu.core_type = #tpu.core_type<tc>, window_params = [{transform_indices = @transform_0, window_bounds = array<i64: 32, 32>}, {transform_indices = @transform_1, window_bounds = array<i64: 32, 96>}, {transform_indices = @transform_2, window_bounds = array<i64: 1, 96>}, {transform_indices = @transform_3, window_bounds = array<i64: 32, 96>}]} {
    %c0_i32 = arith.constant 0 : i32
    %0 = arith.cmpi eq, %arg2, %c0_i32 : i32
    %1 = arith.extui %0 : i1 to i32
    %c0_i32_0 = arith.constant 0 : i32
    %2 = arith.cmpi ne, %1, %c0_i32_0 : i32
    scf.if %2 {
      %cst_10 = arith.constant 0.000000e+00 : f32
      %12 = vector.broadcast %cst_10 : f32 to vector<32x96xf32>
      %c0_11 = arith.constant 0 : index
      %c0_12 = arith.constant 0 : index
      %13 = vector.load %arg7[%c0_11, %c0_12] : memref<32x96xf32, #tpu.memory_space<vmem>>, vector<32x96xf32>
      tpu.vector_store %arg7[%c0_11, %c0_12], %12 {strides = array<i32>} : memref<32x96xf32, #tpu.memory_space<vmem>>, vector<32x96xf32>,
    } else {
    }
    %c0 = arith.constant 0 : index
    %c0_1 = arith.constant 0 : index
    %3 = vector.load %arg7[%c0, %c0_1] : memref<32x96xf32, #tpu.memory_space<vmem>>, vector<32x96xf32>
    %c0_2 = arith.constant 0 : index
    %c0_3 = arith.constant 0 : index
    %4 = vector.load %arg3[%c0_2, %c0_3] : memref<32x32xbf16, #tpu.memory_space<vmem>>, vector<32x32xbf16>
    %c0_4 = arith.constant 0 : index
    %c0_5 = arith.constant 0 : index
    %5 = vector.load %arg4[%c0_4, %c0_5] : memref<32x96xbf16, #tpu.memory_space<vmem>>, vector<32x96xbf16>
    %cst = arith.constant dense<0.000000e+00> : vector<32x96xf32>
    %6 = tpu.matmul %4, %5, %cst {dimension_numbers = #tpu.dot_dimension_numbers<[1], [0], [0], [1], [0, 0, 1, 1], [], []>} : vector<32x32xbf16>, vector<32x96xbf16>, vector<32x96xf32> -> vector<32x96xf32>
    %7 = arith.addf %3, %6 : vector<32x96xf32>
    %c0_6 = arith.constant 0 : index
    %c0_7 = arith.constant 0 : index
    %8 = vector.load %arg7[%c0_6, %c0_7] : memref<32x96xf32, #tpu.memory_space<vmem>>, vector<32x96xf32>
    tpu.vector_store %arg7[%c0_6, %c0_7], %7 {strides = array<i32>} : memref<32x96xf32, #tpu.memory_space<vmem>>, vector<32x96xf32>,
    %c0_i32_8 = arith.constant 0 : i32
    %9 = arith.cmpi eq, %arg2, %c0_i32_8 : i32
    %10 = arith.extui %9 : i1 to i32
    %c0_i32_9 = arith.constant 0 : i32
    %11 = arith.cmpi ne, %10, %c0_i32_9 : i32
    scf.if %11 {
      %c0_10 = arith.constant 0 : index
      %c0_11 = arith.constant 0 : index
      %12 = vector.load %arg7[%c0_10, %c0_11] : memref<32x96xf32, #tpu.memory_space<vmem>>, vector<32x96xf32>
      %c0_12 = arith.constant 0 : index
      %c0_13 = arith.constant 0 : index
      %13 = vector.load %arg5[%c0_12, %c0_13] : memref<1x96xf32, #tpu.memory_space<vmem>>, vector<1x96xf32>
      %14 = vector.broadcast %13 : vector<1x96xf32> to vector<32x96xf32>
      %15 = arith.addf %12, %14 : vector<32x96xf32>
      %16 = arith.truncf %15 : vector<32x96xf32> to vector<32x96xbf16>
      %c0_14 = arith.constant 0 : index
      %c0_15 = arith.constant 0 : index
      %17 = vector.load %arg6[%c0_14, %c0_15] : memref<32x96xbf16, #tpu.memory_space<vmem>>, vector<32x96xbf16>
      tpu.vector_store %arg6[%c0_14, %c0_15], %16 {strides = array<i32>} : memref<32x96xbf16, #tpu.memory_space<vmem>>, vector<32x96xbf16>,
    } else {
    }
    return
  }
  func.func @transform_0(%arg0: i32, %arg1: i32, %arg2: i32) -> (i32, i32) {
    %c0_i32 = arith.constant 0 : i32
    return %arg0, %arg2 : i32, i32
  }
  func.func @transform_1(%arg0: i32, %arg1: i32, %arg2: i32) -> (i32, i32) {
    %c0_i32 = arith.constant 0 : i32
    return %arg2, %arg1 : i32, i32
  }
  func.func @transform_2(%arg0: i32, %arg1: i32, %arg2: i32) -> (i32, i32) {
    %c0_i32 = arith.constant 0 : i32
    %c0_i32_0 = arith.constant 0 : i32
    return %c0_i32, %arg1 : i32, i32
  }
  func.func @transform_3(%arg0: i32, %arg1: i32, %arg2: i32) -> (i32, i32) {
    %c0_i32 = arith.constant 0 : i32
    return %arg0, %arg1 : i32, i32
  }
}

</mosaic_0001>

<llo_original>
// kernel: tpu_custom_call.1
$region0: #{tpu_custom_call.1}
  #allocation0 [shape = 'u32[]', space=smem, size = 0x4, offset = 0x4, fixed_abs, tag = 'smem constant byte address 0x4 - core index']
  #allocation1 [shape = 'u32[144,128]{1,0:T(1,128)}', space=vmem, size = 0x12000, scoped, tag = 'internal scratch']
  #allocation2 [shape = 'f32[32,96]{1,0:T(8,128)}', space=vmem, size = 0x4000, scoped, tag = 'scratch operand']
  %s0 = inlined_call_operand.hbm [shape: bf16[32,32], index: 0, kind: input, shape index: {}]
  %s1 = inlined_call_operand.hbm [shape: bf16[32,96], index: 1, kind: input, shape index: {}]
  %s2 = inlined_call_operand.hbm [shape: f32[1,96], index: 2, kind: input, shape index: {}]
  %s3 = inlined_call_operand.hbm [shape: bf16[32,96], index: 3, kind: output, shape index: {}]
  %s4 = sld [smem:[#allocation0]]
  $region42: #{tpu_custom_call.1} parent=0
    _
  %s6 = ssub.s32 1, %s4
  %s7 = scalar_select 0, %s6, %s4
  $region1: #{tpu_custom_call.1} parent=0
    #allocation3 [shape = 'u8[8192]{0}', space=vmem, size = 0x2000, scoped, tag = 'input window, operand 0, single buffered']
    #allocation4 [shape = 's32[1]{0}', space=sflag, size = 0x4, scoped, tag = 'scoped memory for tpu_custom_call.1']
    #allocation5 [shape = 's32[1]{0}', space=sflag, size = 0x4, scoped, tag = 'scoped memory for tpu_custom_call.1']
    #allocation6 [shape = 'u8[8192]{0}', space=vmem, size = 0x2000, scoped, tag = 'input window, operand 1, single buffered']
    #allocation7 [shape = 's32[1]{0}', space=sflag, size = 0x4, scoped, tag = 'scoped memory for tpu_custom_call.1']
    #allocation8 [shape = 'u8[512]{0}', space=vmem, size = 0x400, scoped, tag = 'input window, operand 2, single buffered']
    #allocation9 [shape = 'u8[8192]{0}', space=vmem, size = 0x2000, scoped, tag = 'output window, operand 0, single buffered']
    %8 = vsyncpa [#allocation4], 0
    %9 = vsyncpa [#allocation7], 0
    %10 = vsyncpa [#allocation5], 0
    // Predicated region
    $region2: #{tpu_custom_call.1} parent=1 // pred_check
      _
    $region3: #{tpu_custom_call.1} parent=1 // pred_check_branch
      %12 = sbr.rel (0) target = $region5
    $region4: #{tpu_custom_call.1} parent=1 // pred_region
      %s14 = ssub.s32 256, 256
      %15 = vsyncadd [#allocation4], %s14
      %s16 = sshll.u32 [#allocation3], 4
      %s17 = int_to_ptr.vmem [resolvable:$true] %s16
      %22 = dma.hbm_to_vmem [thread:$0]  %s0, 256, %s17, [#allocation4], 64, 64, 4
    $region5: #{tpu_custom_call.1} parent=1 // pred_fallthru
      _
    // Predicated region
    $region6: #{tpu_custom_call.1} parent=1 // pred_check
      _
    $region7: #{tpu_custom_call.1} parent=1 // pred_check_branch
      %24 = sbr.rel (0) target = $region9
    $region8: #{tpu_custom_call.1} parent=1 // pred_region
      %s26 = ssub.s32 256, 256
      %27 = vsyncadd [#allocation7], %s26
      %s28 = sshll.u32 [#allocation6], 4
      %s29 = int_to_ptr.vmem [resolvable:$true] %s28
      %34 = dma.hbm_to_vmem [thread:$0]  %s1, 256, %s29, [#allocation7], 64, 64, 4
    $region9: #{tpu_custom_call.1} parent=1 // pred_fallthru
      _
    // Predicated region
    $region10: #{tpu_custom_call.1} parent=1 // pred_check
      _
    $region11: #{tpu_custom_call.1} parent=1 // pred_check_branch
      %36 = sbr.rel (0) target = $region13
    $region12: #{tpu_custom_call.1} parent=1 // pred_region
      %s38 = ssub.s32 16, 16
      %39 = vsyncadd [#allocation7], %s38
      %s41 = sshll.u32 [#allocation8], 4
      %s42 = int_to_ptr.vmem [resolvable:$true] %s41
      %44 = dma.hbm_to_vmem [thread:$0]  %s2, 16, %s42, [#allocation7]
    $region13: #{tpu_custom_call.1} parent=1 // pred_fallthru
      _
    // Predicated region
    $region14: #{tpu_custom_call.1} parent=1 // pred_check
      _
    $region15: #{tpu_custom_call.1} parent=1 // pred_check_branch
      %46 = sbr.rel (0) target = $region17
    $region16: #{tpu_custom_call.1} parent=1 // pred_region
      %47 = dma.done [#allocation4], 256
    $region17: #{tpu_custom_call.1} parent=1 // pred_fallthru
      _
    // Predicated region
    $region18: #{tpu_custom_call.1} parent=1 // pred_check
      _
    $region19: #{tpu_custom_call.1} parent=1 // pred_check_branch
      %49 = sbr.rel (0) target = $region21
    $region20: #{tpu_custom_call.1} parent=1 // pred_region
      %50 = dma.done [#allocation7], 256
    $region21: #{tpu_custom_call.1} parent=1 // pred_fallthru
      _
    // Predicated region
    $region22: #{tpu_custom_call.1} parent=1 // pred_check
      _
    $region23: #{tpu_custom_call.1} parent=1 // pred_check_branch
      %52 = sbr.rel (0) target = $region25
    $region24: #{tpu_custom_call.1} parent=1 // pred_region
      %53 = dma.done [#allocation7], 16
    $region25: #{tpu_custom_call.1} parent=1 // pred_fallthru
      _
    %p55 = scmp.eq.s32.totalorder 0, 0
    // Predicated region
    $region26: #{tpu_custom_call.1} parent=1 // pred_check
      %p56 = pneg %p55
    $region27: #{tpu_custom_call.1} parent=1 // pred_check_branch
      %58 = sbr.rel (%p56) target = $region29
    $region28: #{tpu_custom_call.1} parent=1 // pred_region
      %vm59 = vcmask 785408
      %60 = vst.msk [vmem:[#allocation2] sm:$0xff] %vm59, 0.0
      %61 = vst.msk [vmem:[#allocation2 + $0x8] sm:$0xff] %vm59, 0.0
      %62 = vst.msk [vmem:[#allocation2 + $0x10] sm:$0xff] %vm59, 0.0
      %63 = vst.msk [vmem:[#allocation2 + $0x18] sm:$0xff] %vm59, 0.0
    $region29: #{tpu_custom_call.1} parent=1 // pred_fallthru
      _
    %v64 = vld [vmem:[#allocation2] sm:$0xff]
    %v65 = vld [vmem:[#allocation2 + $0x8] sm:$0xff]
    %v66 = vld [vmem:[#allocation2 + $0x10] sm:$0xff]
    %v67 = vld [vmem:[#allocation2 + $0x18] sm:$0xff]
    %v68 = vld [vmem:[#allocation3] sm:$0xf]
    %v69 = vld [vmem:[#allocation3 + $0x4] sm:$0xf]
    %v70 = vld [vmem:[#allocation3 + $0x8] sm:$0xf]
    %v71 = vld [vmem:[#allocation3 + $0xc] sm:$0xf]
    %v72 = vld [vmem:[#allocation6] sm:$0xf]
    %v73 = vld [vmem:[#allocation6 + $0x4] sm:$0xf]
    %v74 = vld [vmem:[#allocation6 + $0x8] sm:$0xf]
    %v75 = vld [vmem:[#allocation6 + $0xc] sm:$0xf]
    %v80 = vunpack.c.l.b16 %v68
    %v81 = vunpack.c.l.b16 %v69
    %v82 = vunpack.c.l.b16 %v70
    %v83 = vunpack.c.l.b16 %v71
    %v84 = vpack.c.b16 %v81, %v80
    %v85 = vpack.c.b16 %v83, %v82
    %v90 = vunpack.c.l.b16 %v72
    %v91 = vunpack.c.l.b16 %v73
    %v92 = vunpack.c.l.b16 %v74
    %v93 = vunpack.c.l.b16 %v75
    %v94 = vpack.c.b16 %v91, %v90
    %v95 = vpack.c.b16 %v93, %v92
    %vm98 = vcmask 261120
    %v100 = vsel %vm98, %v84, 0
    %v103 = vsel %vm98, %v85, 0
    %105 = vmatprep.subr.bf16.mxu0 0
    %106 = vmatpush1.bf16.msra.mxu0 %v94
    %107 = vmatprep.subr.bf16.mxu0 0
    %108 = vmatpush1.bf16.msra.mxu0 %v95
    %109 = vmatprep.subr.bf16.mxu0 0
    %110 = vmatpush1.bf16.msra.mxu0 0
    %111 = vmatprep.subr.bf16.mxu0 0
    %112 = vmatpush1.bf16.msra.mxu0 0
    %113 = vmatprep.subr.bf16.mxu0 0
    %114 = vmatpush1.bf16.msra.mxu0 0
    %115 = vmatprep.subr.bf16.mxu0 0
    %116 = vmatpush1.bf16.msra.mxu0 0
    %117 = vmatprep.subr.bf16.mxu0 0
    %118 = vmatpush1.bf16.msra.mxu0 0
    %119 = vmatprep.subr.bf16.mxu0 0
    %120 = vmatpush1.bf16.msra.mxu0 0
    %121 = vmatprep.subr.bf16.mxu0 0
    %122 = vmatpush1.bf16.msra.mxu0 0
    %123 = vmatprep.subr.bf16.mxu0 0
    %124 = vmatpush1.bf16.msra.mxu0 0
    %125 = vmatprep.subr.bf16.mxu0 0
    %126 = vmatpush1.bf16.msra.mxu0 0
    %127 = vmatprep.subr.bf16.mxu0 0
    %128 = vmatpush1.bf16.msra.mxu0 0
    %129 = vmatprep.subr.bf16.mxu0 0
    %130 = vmatpush1.bf16.msra.mxu0 0
    %131 = vmatprep.subr.bf16.mxu0 0
    %132 = vmatpush1.bf16.msra.mxu0 0
    %133 = vmatprep.subr.bf16.mxu0 0
    %134 = vmatpush1.bf16.msra.mxu0 0
    %135 = vmatprep.subr.bf16.mxu0 0
    %136 = vmatpush1.bf16.msra.mxu0 0
    %137 = vmatprep.mubr.bf16.mxu0 0
    %138 = vmatmul.mubr.bf16.gmra.mrb[0].mxu0 %v100
    %v139 = vpop.f32.mrb[0].mxu0
    %v140 = vadd.f32 0.0, %v139
    %v141 = vpop.f32.mrb[0].mxu0
    %v142 = vpop.f32.mrb[0].mxu0
    %v143 = vadd.f32 0.0, %v142
    %v144 = vpop.f32.mrb[0].mxu0
    %145 = vmatprep.mubr.bf16.mxu0 0
    %146 = vmatmul.mubr.bf16.gmra.mrb[0].mxu0 %v103
    %v147 = vpop.f32.mrb[0].mxu0
    %v148 = vadd.f32 0.0, %v147
    %v149 = vpop.f32.mrb[0].mxu0
    %v150 = vpop.f32.mrb[0].mxu0
    %v151 = vadd.f32 0.0, %v150
    %v152 = vpop.f32.mrb[0].mxu0
    %153 = vdwg.mxu0
    %v154 = vadd.f32 %v64, %v140
    %v155 = vadd.f32 %v65, %v143
    %v156 = vadd.f32 %v66, %v148
    %v157 = vadd.f32 %v67, %v151
    %vm158 = vcmask 785408
    %159 = vst.msk [vmem:[#allocation2] sm:$0xff] %vm158, %v154
    %160 = vst.msk [vmem:[#allocation2 + $0x8] sm:$0xff] %vm158, %v155
    %161 = vst.msk [vmem:[#allocation2 + $0x10] sm:$0xff] %vm158, %v156
    %162 = vst.msk [vmem:[#allocation2 + $0x18] sm:$0xff] %vm158, %v157
    // Predicated region
    $region30: #{tpu_custom_call.1} parent=1 // pred_check
      %p163 = pneg %p55
    $region31: #{tpu_custom_call.1} parent=1 // pred_check_branch
      %165 = sbr.rel (%p163) target = $region33
    $region32: #{tpu_custom_call.1} parent=1 // pred_region
      %v166 = vld [vmem:[#allocation2] sm:$0xff]
      %v167 = vld [vmem:[#allocation2 + $0x8] sm:$0xff]
      %v168 = vld [vmem:[#allocation2 + $0x10] sm:$0xff]
      %v169 = vld [vmem:[#allocation2 + $0x18] sm:$0xff]
      %v170 = vld [vmem:[#allocation8] sm:$0x1]
      %v172 = vlaneseq
      %v173 = vshrl.u32 %v172, 7
      %v174 = vsub.s32 0, %v173
      %v175 = vrot.slane %v170, %v174
      %v177 = vadd.f32 %v166, %v175
      %v178 = vadd.f32 %v167, %v175
      %v179 = vadd.f32 %v168, %v175
      %v180 = vadd.f32 %v169, %v175
      %v181 = vpack.c.bf16 %v178, %v177
      %v182 = vpack.c.bf16 %v180, %v179
      %v185 = vunpack.c.l.b16 %v181
      %v186 = vunpack.c.h.b16 %v181
      %v187 = vunpack.c.l.b16 %v182
      %v188 = vunpack.c.h.b16 %v182
      %v189 = vpack.c.b16 %v185, %v185
      %v190 = vpack.c.b16 %v186, %v186
      %v191 = vpack.c.b16 %v187, %v187
      %v192 = vpack.c.b16 %v188, %v188
      %vm197 = vcmask 781312
      %198 = vst.msk [vmem:[#allocation9] sm:$0xf] %vm197, %v189
      %199 = vst.msk [vmem:[#allocation9 + $0x4] sm:$0xf] %vm197, %v190
      %200 = vst.msk [vmem:[#allocation9 + $0x8] sm:$0xf] %vm197, %v191
      %201 = vst.msk [vmem:[#allocation9 + $0xc] sm:$0xf] %vm197, %v192
    $region33: #{tpu_custom_call.1} parent=1 // pred_fallthru
      _
    // Predicated region
    $region34: #{tpu_custom_call.1} parent=1 // pred_check
      _
    $region35: #{tpu_custom_call.1} parent=1 // pred_check_branch
      %203 = sbr.rel (0) target = $region37
    $region36: #{tpu_custom_call.1} parent=1 // pred_region
      %s205 = ssub.s32 256, 256
      %206 = vsyncadd [#allocation5], %s205
      %s207 = sshll.u32 [#allocation9], 4
      %s208 = int_to_ptr.vmem [resolvable:$true] %s207
      %213 = dma.vmem_to_hbm [thread:$0]  %s208, 256, %s3, [#allocation5], 64, 64, 4
    $region37: #{tpu_custom_call.1} parent=1 // pred_fallthru
      _
    // Predicated region
    $region38: #{tpu_custom_call.1} parent=1 // pred_check
      _
    $region39: #{tpu_custom_call.1} parent=1 // pred_check_branch
      %215 = sbr.rel (0) target = $region41
    $region40: #{tpu_custom_call.1} parent=1 // pred_region
      %216 = dma.done [#allocation5], 256
    $region41: #{tpu_custom_call.1} parent=1 // pred_fallthru
      _
    %217 = vsyncpa [#allocation4], 1
    %218 = vsyncpa [#allocation7], 1
    %219 = vsyncpa [#allocation5], 1

</llo_original>
